<compile_context>
chip_gen: v7x
topology: tpu7x:2x2x1
jax: 0.10.0
libtpu: 0.0.40
codegen_flags: <defaults>
</compile_context>

<pallas_src>
import functools
import math

import numpy as np
import jax
import jax.numpy as jnp
from jax.experimental import pallas as pl
from jax.experimental.pallas import tpu as pltpu


def _cdiv(a, b):
    return -(-a // b)


def _round_up(a, b):
    return _cdiv(a, b) * b


def make_binstep_constants(edgebinlist, weight=100.0):
    """Lane-interleaved thresholds + lane-replication matrix for the kernel.

    Returns (thr, repmat, nbins, G, W):
      thr    : (2, W) f32   thr[0, c] = fl(weight*edge[c % nbins])      (lower edge)
                            thr[1, c] = fl(weight*edge[c % nbins + 1])  (upper edge)
      repmat : (G, W) bf16  0/1 matrix, repmat[i, c] = (c // nbins == i)
      G      : batch scalars per output row (128 // gcd(nbins, 128))
      W      : G * nbins, a multiple of 128 (lane-dense output rows)
    """
    edges = np.asarray(edgebinlist, dtype=np.float32)
    nbins = int(edges.shape[0]) - 1
    assert nbins >= 1, "need at least two bin edges"

    g = 128 // math.gcd(nbins, 128)
    w = g * nbins

    # Same f32 arithmetic as torch's  bias = -1.0 * weight * edge  (negation is exact).
    w_edges = (np.float32(weight) * edges).astype(np.float32)          # (nbins+1,)
    thr = np.stack([np.tile(w_edges[:nbins], g),                        # lower edges
                    np.tile(w_edges[1:], g)]).astype(np.float32)        # upper edges

    col = np.arange(w)
    repmat = (col[None, :] // nbins == np.arange(g)[:, None])           # (G, W) 0/1

    return (jnp.asarray(thr, dtype=jnp.float32),
            jnp.asarray(repmat, dtype=jnp.bfloat16),
            nbins, g, w)


def binstep_kernel(x_ref, thr_ref, rep_ref, o_ref, *, weight):
    # x_ref:   (TILE_R, G)  f32   each row = G consecutive batch scalars
    # thr_ref: (2, W)       f32   lane-interleaved lower/upper thresholds (resident)
    # rep_ref: (G, W)       bf16  0/1 lane-replication matrix (resident)
    # o_ref:   (TILE_R, W)  out   row-major == torch (N, nbins) layout
    xw = x_ref[...] * weight                                   # fl(weight * x), exact f32

    # Dekker-style 3-way split: hi + mid + lo == xw exactly, and each piece is exactly
    # representable in bf16, so the 0/1 replication matmuls below (bf16 in, f32 acc)
    # reproduce xw exactly -- bin-boundary behaviour matches torch bit-for-bit.
    hi_b = xw.astype(jnp.bfloat16)
    r1 = xw - hi_b.astype(jnp.float32)
    mid_b = r1.astype(jnp.bfloat16)
    lo_b = (r1 - mid_b.astype(jnp.float32)).astype(jnp.bfloat16)

    rep = rep_ref[...]
    xr = jnp.dot(hi_b, rep, preferred_element_type=jnp.float32)
    xr = xr + jnp.dot(mid_b, rep, preferred_element_type=jnp.float32)
    xr = xr + jnp.dot(lo_b, rep, preferred_element_type=jnp.float32)
    # xr[r, c] == xw[r, c // nbins] exactly (each x value replicated nbins times on lanes).

    t_lo = thr_ref[0:1, :]                                     # (1, W), broadcast on sublanes
    t_hi = thr_ref[1:2, :]
    # step(xw - t_lo > 0) - step(xw - t_hi > 0)  ==  (xw > t_lo) & (xw <= t_hi)
    inside = (xr > t_lo) & (xr <= t_hi)
    o_ref[...] = jnp.where(inside, 1.0, 0.0).astype(o_ref.dtype)
    # TODO(synk): NaN inputs map to 0 here; torch's relu(sign(NaN)) would propagate NaN.


def bin_step_layer(x, edgebinlist, *, weight=100.0, out_dtype=jnp.bfloat16,
                   f32_slab_bytes=2 << 20):
    """BinStepLayer.forward.  x: (N, 1) or (N,) float32 -> (N, nbins) 0/1 indicators.

    out_dtype defaults to bfloat16 (values are exactly 0/1); pass jnp.float32 for a
    drop-in match of the torch dtype.
    """
    thr, repmat, nbins, g, w = make_binstep_constants(edgebinlist, weight)

    N = int(x.shape[0])
    x_flat = x.reshape(N).astype(jnp.float32)

    # ---- tile sizing: per-step f32 working slab is (tile_r, W); keep it ~f32_slab_bytes
    # (fits v5e's 16 MiB scoped-VMEM default and v7x's 64 MiB physical VMEM with the
    # double-buffered in/out blocks), keep row blocks multiples of 16 (clean bf16 tiling),
    # and aim for >= 4 grid steps when there is enough data (pipelining + v7x megacore).
    rows_total = _cdiv(N, g)
    tile_r = max(16, (f32_slab_bytes // (w * 4)) // 16 * 16)
    if rows_total >= 64:
        tile_r = min(tile_r, max(16, _round_up(_cdiv(rows_total, 4), 16)))
    tile_r = min(tile_r, _round_up(rows_total, 16))
    rows_pad = _round_up(rows_total, tile_r)
    n_pad = rows_pad * g

    if n_pad != N:
        x_flat = jnp.pad(x_flat, (0, n_pad - N))
    x2d = x_flat.reshape(rows_pad, g)                    # free row-major reshape

    out2d = pl.pallas_call(
        functools.partial(binstep_kernel, weight=float(weight)),
        out_shape=jax.ShapeDtypeStruct((rows_pad, w), out_dtype),
        grid=(rows_pad // tile_r,),
        in_specs=[
            pl.BlockSpec((tile_r, g), lambda i: (i, 0)),   # x tiles, streamed
            pl.BlockSpec((2, w), lambda i: (0, 0)),        # thresholds, VMEM-resident
            pl.BlockSpec((g, w), lambda i: (0, 0)),        # replication matrix, resident
        ],
        out_specs=pl.BlockSpec((tile_r, w), lambda i: (i, 0)),
        compiler_params=pltpu.CompilerParams(
            dimension_semantics=("parallel",),             # megacore sharding on v7x
            vmem_limit_bytes=32 * 1024 * 1024),
    )(x2d, thr, repmat)

    # (rows_pad, W) -> (n_pad, nbins) is a free row-major reshape (bin index is the
    # fastest-varying lane index); only the batch padding is sliced off.
    out = out2d.reshape(n_pad, nbins)
    if n_pad != N:
        out = out[:N]
    return out


# ----------------------------------------------------------------------------------
# Dense torch-equivalent reference (exactly BinStepLayer.__init__ + forward), in numpy.
# ----------------------------------------------------------------------------------
def binstep_reference(x_np, edgebinlist, weight=100.0):
    edges = np.asarray(edgebinlist, dtype=np.float32)
    nbins = edges.shape[0] - 1
    w1 = np.zeros((2 * nbins, 1), np.float32)
    b1 = np.zeros((2 * nbins,), np.float32)
    w2 = np.zeros((nbins, 2 * nbins), np.float32)
    wgt = np.float32(weight)
    for i in range(nbins + 1):
        if i == 0:
            w1[2 * i, 0] = wgt
            b1[2 * i] = np.float32(-1.0) * wgt * edges[i]
            w2[i, 2 * i] = 1.0
        elif i == nbins:
            w1[2 * i - 1, 0] = wgt
            b1[2 * i - 1] = np.float32(-1.0) * wgt * edges[i]
            w2[i - 1, 2 * i - 1] = -1.0
        else:
            w1[2 * i - 1, 0] = wgt
            b1[2 * i - 1] = np.float32(-1.0) * wgt * edges[i]
            w1[2 * i, 0] = wgt
            b1[2 * i] = np.float32(-1.0) * wgt * edges[i]
            w2[i, 2 * i - 1] = 1.0
            w2[i - 1, 2 * i] = -1.0
    x_np = np.asarray(x_np, dtype=np.float32).reshape(-1, 1)
    h = x_np * w1[:, 0][None, :] + b1[None, :]           # Linear(1, 2*nbins), exact f32
    s = np.maximum(np.sign(h), 0.0).astype(np.float32)   # relu(sign(.))
    return s @ w2.T                                       # sparse +/-1 layer2 (exact)


if __name__ == "__main__":
    # 4 bins over [0, 1]; batch of 8 scalar inputs (x has shape (N, 1) as in torch).
    edgebinlist = np.linspace(0.0, 1.0, 5, dtype=np.float32)        # nbins = 4
    key = jax.random.PRNGKey(0)
    x = jax.random.uniform(key, (8, 1), dtype=jnp.float32)

    out_bf16 = jax.block_until_ready(bin_step_layer(x, edgebinlist))                      # default bf16
    out_f32 = jax.block_until_ready(bin_step_layer(x, edgebinlist, out_dtype=jnp.float32))

    ref = binstep_reference(np.asarray(x), edgebinlist)
    assert out_bf16.shape == (8, 4) and out_f32.shape == (8, 4)
    np.testing.assert_allclose(np.asarray(out_bf16.astype(jnp.float32)), ref, rtol=0, atol=0)
    np.testing.assert_allclose(np.asarray(out_f32), ref, rtol=0, atol=0)

    print("KERNEL_OK")
</pallas_src>

<mosaic_0001>
module attributes {stable_mosaic.version = 11 : i64} {
  func.func @binstep_kernel(%arg0: i32, %arg1: memref<16x32xf32, #tpu.memory_space<vmem>>, %arg2: memref<2x128xf32, #tpu.memory_space<vmem>>, %arg3: memref<32x128xbf16, #tpu.memory_space<vmem>>, %arg4: memref<16x128xbf16, #tpu.memory_space<vmem>>) attributes {dimension_semantics = [#tpu.dimension_semantics<parallel>], iteration_bounds = array<i64: 1>, scalar_prefetch = 0 : i64, scratch_operands = 0 : i64, tpu.core_type = #tpu.core_type<tc>, window_params = [{transform_indices = @transform_0, window_bounds = array<i64: 16, 32>}, {pipeline_mode = #tpu.pipeline_mode<synchronous>, transform_indices = @transform_1, window_bounds = array<i64: 2, 128>}, {pipeline_mode = #tpu.pipeline_mode<synchronous>, transform_indices = @transform_2, window_bounds = array<i64: 32, 128>}, {transform_indices = @transform_3, window_bounds = array<i64: 16, 128>}]} {
    %c0 = arith.constant 0 : index
    %c0_0 = arith.constant 0 : index
    %0 = vector.load %arg1[%c0, %c0_0] : memref<16x32xf32, #tpu.memory_space<vmem>>, vector<16x32xf32>
    %cst = arith.constant 1.000000e+02 : f32
    %1 = vector.broadcast %cst : f32 to vector<16x32xf32>
    %2 = arith.mulf %0, %1 : vector<16x32xf32>
    %3 = arith.truncf %2 : vector<16x32xf32> to vector<16x32xbf16>
    %4 = arith.extf %3 : vector<16x32xbf16> to vector<16x32xf32>
    %5 = arith.subf %2, %4 : vector<16x32xf32>
    %6 = arith.truncf %5 : vector<16x32xf32> to vector<16x32xbf16>
    %7 = arith.extf %6 : vector<16x32xbf16> to vector<16x32xf32>
    %8 = arith.subf %5, %7 : vector<16x32xf32>
    %9 = arith.truncf %8 : vector<16x32xf32> to vector<16x32xbf16>
    %c0_1 = arith.constant 0 : index
    %c0_2 = arith.constant 0 : index
    %10 = vector.load %arg3[%c0_1, %c0_2] : memref<32x128xbf16, #tpu.memory_space<vmem>>, vector<32x128xbf16>
    %cst_3 = arith.constant dense<0.000000e+00> : vector<16x128xf32>
    %11 = tpu.matmul %3, %10, %cst_3 {dimension_numbers = #tpu.dot_dimension_numbers<[1], [0], [0], [1], [0, 0, 1, 1], [], []>} : vector<16x32xbf16>, vector<32x128xbf16>, vector<16x128xf32> -> vector<16x128xf32>
    %cst_4 = arith.constant dense<0.000000e+00> : vector<16x128xf32>
    %12 = tpu.matmul %6, %10, %cst_4 {dimension_numbers = #tpu.dot_dimension_numbers<[1], [0], [0], [1], [0, 0, 1, 1], [], []>} : vector<16x32xbf16>, vector<32x128xbf16>, vector<16x128xf32> -> vector<16x128xf32>
    %13 = arith.addf %11, %12 : vector<16x128xf32>
    %cst_5 = arith.constant dense<0.000000e+00> : vector<16x128xf32>
    %14 = tpu.matmul %9, %10, %cst_5 {dimension_numbers = #tpu.dot_dimension_numbers<[1], [0], [0], [1], [0, 0, 1, 1], [], []>} : vector<16x32xbf16>, vector<32x128xbf16>, vector<16x128xf32> -> vector<16x128xf32>
    %15 = arith.addf %13, %14 : vector<16x128xf32>
    %c0_6 = arith.constant 0 : index
    %c0_7 = arith.constant 0 : index
    %16 = vector.load %arg2[%c0_6, %c0_7] : memref<2x128xf32, #tpu.memory_space<vmem>>, vector<1x128xf32>
    %c1 = arith.constant 1 : index
    %c0_8 = arith.constant 0 : index
    %17 = vector.load %arg2[%c1, %c0_8] : memref<2x128xf32, #tpu.memory_space<vmem>>, vector<1x128xf32>
    %18 = vector.broadcast %16 : vector<1x128xf32> to vector<16x128xf32>
    %19 = arith.cmpf ogt, %15, %18 : vector<16x128xf32>
    %20 = vector.broadcast %17 : vector<1x128xf32> to vector<16x128xf32>
    %21 = arith.cmpf ole, %15, %20 : vector<16x128xf32>
    %22 = arith.andi %19, %21 : vector<16x128xi1>
    %cst_9 = arith.constant 1.000000e+00 : f32
    %cst_10 = arith.constant 0.000000e+00 : f32
    %23 = vector.broadcast %cst_9 : f32 to vector<16x128xf32>
    %24 = vector.broadcast %cst_10 : f32 to vector<16x128xf32>
    %25 = arith.select %22, %23, %24 : vector<16x128xi1>, vector<16x128xf32>
    %26 = arith.truncf %25 : vector<16x128xf32> to vector<16x128xbf16>
    %c0_11 = arith.constant 0 : index
    %c0_12 = arith.constant 0 : index
    %27 = vector.load %arg4[%c0_11, %c0_12] : memref<16x128xbf16, #tpu.memory_space<vmem>>, vector<16x128xbf16>
    tpu.vector_store %arg4[%c0_11, %c0_12], %26 {strides = array<i32>} : memref<16x128xbf16, #tpu.memory_space<vmem>>, vector<16x128xbf16>,
    return
  }
  func.func @transform_0(%arg0: i32) -> (i32, i32) {
    %c0_i32 = arith.constant 0 : i32
    %c0_i32_0 = arith.constant 0 : i32
    return %arg0, %c0_i32 : i32, i32
  }
  func.func @transform_1(%arg0: i32) -> (i32, i32) {
    %c0_i32 = arith.constant 0 : i32
    %c0_i32_0 = arith.constant 0 : i32
    %c0_i32_1 = arith.constant 0 : i32
    return %c0_i32, %c0_i32_0 : i32, i32
  }
  func.func @transform_2(%arg0: i32) -> (i32, i32) {
    %c0_i32 = arith.constant 0 : i32
    %c0_i32_0 = arith.constant 0 : i32
    %c0_i32_1 = arith.constant 0 : i32
    return %c0_i32, %c0_i32_0 : i32, i32
  }
  func.func @transform_3(%arg0: i32) -> (i32, i32) {
    %c0_i32 = arith.constant 0 : i32
    %c0_i32_0 = arith.constant 0 : i32
    return %arg0, %c0_i32 : i32, i32
  }
}

</mosaic_0001>

<llo_original>
// kernel: tpu_custom_call.1
$region0: #{tpu_custom_call.1}
  #allocation0 [shape = 'u32[]', space=smem, size = 0x4, offset = 0x4, fixed_abs, tag = 'smem constant byte address 0x4 - core index']
  #allocation1 [shape = 'u32[144,128]{1,0:T(1,128)}', space=vmem, size = 0x12000, scoped, tag = 'internal scratch']
  %s0 = inlined_call_operand.hbm [shape: f32[16,32], index: 0, kind: input, shape index: {}]
  %s1 = inlined_call_operand.vmem [shape: f32[2,128], index: 1, kind: input, shape index: {}]
  %s2 = inlined_call_operand.hbm [shape: bf16[32,128], index: 2, kind: input, shape index: {}]
  %s3 = inlined_call_operand.hbm [shape: bf16[16,128], index: 3, kind: output, shape index: {}]
  %s4 = sld [smem:[#allocation0]]
  $region30: #{tpu_custom_call.1} parent=0
    _
  %s6 = ssub.s32 1, %s4
  %s7 = scalar_select 0, %s6, %s4
  $region1: #{tpu_custom_call.1} parent=0
    #allocation2 [shape = 'u8[8192]{0}', space=vmem, size = 0x2000, scoped, tag = 'input window, operand 0, single buffered']
    #allocation3 [shape = 's32[1]{0}', space=sflag, size = 0x4, scoped, tag = 'scoped memory for tpu_custom_call.1']
    #allocation4 [shape = 's32[1]{0}', space=sflag, size = 0x4, scoped, tag = 'scoped memory for tpu_custom_call.1']
    #allocation5 [shape = 'u8[8192]{0}', space=vmem, size = 0x2000, scoped, tag = 'input window, operand 2, single buffered']
    #allocation6 [shape = 's32[1]{0}', space=sflag, size = 0x4, scoped, tag = 'scoped memory for tpu_custom_call.1']
    #allocation7 [shape = 'u8[4096]{0}', space=vmem, size = 0x1000, scoped, tag = 'output window, operand 0, single buffered']
    %8 = vsyncpa [#allocation3], 0
    %9 = vsyncpa [#allocation6], 0
    %10 = vsyncpa [#allocation4], 0
    // Predicated region
    $region2: #{tpu_custom_call.1} parent=1 // pred_check
      _
    $region3: #{tpu_custom_call.1} parent=1 // pred_check_branch
      %12 = sbr.rel (0) target = $region5
    $region4: #{tpu_custom_call.1} parent=1 // pred_region
      %s14 = ssub.s32 256, 256
      %15 = vsyncadd [#allocation3], %s14
      %s16 = sshll.u32 [#allocation2], 4
      %s17 = int_to_ptr.vmem [resolvable:$true] %s16
      %22 = dma.hbm_to_vmem [thread:$0]  %s0, 256, %s17, [#allocation3], 128, 128, 8
    $region5: #{tpu_custom_call.1} parent=1 // pred_fallthru
      _
    // Predicated region
    $region6: #{tpu_custom_call.1} parent=1 // pred_check
      _
    $region7: #{tpu_custom_call.1} parent=1 // pred_check_branch
      %24 = sbr.rel (0) target = $region9
    $region8: #{tpu_custom_call.1} parent=1 // pred_region
      _
    $region9: #{tpu_custom_call.1} parent=1 // pred_fallthru
      _
    // Predicated region
    $region10: #{tpu_custom_call.1} parent=1 // pred_check
      _
    $region11: #{tpu_custom_call.1} parent=1 // pred_check_branch
      %26 = sbr.rel (0) target = $region13
    $region12: #{tpu_custom_call.1} parent=1 // pred_region
      %s28 = ssub.s32 256, 256
      %29 = vsyncadd [#allocation6], %s28
      %s30 = sshll.u32 [#allocation5], 4
      %s31 = int_to_ptr.vmem [resolvable:$true] %s30
      %36 = dma.hbm_to_vmem [thread:$0]  %s2, 256, %s31, [#allocation6], 64, 64, 4
    $region13: #{tpu_custom_call.1} parent=1 // pred_fallthru
      _
    // Predicated region
    $region14: #{tpu_custom_call.1} parent=1 // pred_check
      _
    $region15: #{tpu_custom_call.1} parent=1 // pred_check_branch
      %38 = sbr.rel (0) target = $region17
    $region16: #{tpu_custom_call.1} parent=1 // pred_region
      %39 = dma.done [#allocation3], 256
    $region17: #{tpu_custom_call.1} parent=1 // pred_fallthru
      _
    // Predicated region
    $region18: #{tpu_custom_call.1} parent=1 // pred_check
      _
    $region19: #{tpu_custom_call.1} parent=1 // pred_check_branch
      %41 = sbr.rel (0) target = $region21
    $region20: #{tpu_custom_call.1} parent=1 // pred_region
      %42 = dma.done [#allocation6], 256
    $region21: #{tpu_custom_call.1} parent=1 // pred_fallthru
      _
    %v44 = vld [vmem:[#allocation2] sm:$0xff]
    %v45 = vld [vmem:[#allocation2 + $0x8] sm:$0xff]
    %v46 = vmul.f32 %v44, 100.0
    %v47 = vmul.f32 %v45, 100.0
    %v48 = vpack.c.bf16 %v47, %v46
    %v49 = vunpack.c.l.bf16 %v48
    %v50 = vunpack.c.h.bf16 %v48
    %v51 = vsub.f32 %v46, %v49
    %v52 = vsub.f32 %v47, %v50
    %v53 = vpack.c.bf16 %v52, %v51
    %v54 = vunpack.c.l.bf16 %v53
    %v55 = vunpack.c.h.bf16 %v53
    %v56 = vsub.f32 %v51, %v54
    %v57 = vsub.f32 %v52, %v55
    %v58 = vpack.c.bf16 %v57, %v56
    %v59 = vld [vmem:[#allocation5] sm:$0xf]
    %v60 = vld [vmem:[#allocation5 + $0x4] sm:$0xf]
    %v61 = vld [vmem:[#allocation5 + $0x8] sm:$0xf]
    %v62 = vld [vmem:[#allocation5 + $0xc] sm:$0xf]
    %v67 = vunpack.c.l.b16 %v59
    %v68 = vunpack.c.l.b16 %v60
    %v69 = vunpack.c.l.b16 %v61
    %v70 = vunpack.c.l.b16 %v62
    %v71 = vpack.c.b16 %v68, %v67
    %v72 = vpack.c.b16 %v70, %v69
    %vm75 = vcmask 261120
    %v77 = vsel %vm75, %v53, 0
    %79 = vmatprep.subr.bf16.mxu0 0
    %80 = vmatpush1.bf16.msra.mxu0 %v71
    %81 = vmatprep.subr.bf16.mxu0 0
    %82 = vmatpush1.bf16.msra.mxu0 %v72
    %83 = vmatprep.subr.bf16.mxu0 0
    %84 = vmatpush1.bf16.msra.mxu0 0
    %85 = vmatprep.subr.bf16.mxu0 0
    %86 = vmatpush1.bf16.msra.mxu0 0
    %87 = vmatprep.subr.bf16.mxu0 0
    %88 = vmatpush1.bf16.msra.mxu0 0
    %89 = vmatprep.subr.bf16.mxu0 0
    %90 = vmatpush1.bf16.msra.mxu0 0
    %91 = vmatprep.subr.bf16.mxu0 0
    %92 = vmatpush1.bf16.msra.mxu0 0
    %93 = vmatprep.subr.bf16.mxu0 0
    %94 = vmatpush1.bf16.msra.mxu0 0
    %95 = vmatprep.subr.bf16.mxu0 0
    %96 = vmatpush1.bf16.msra.mxu0 0
    %97 = vmatprep.subr.bf16.mxu0 0
    %98 = vmatpush1.bf16.msra.mxu0 0
    %99 = vmatprep.subr.bf16.mxu0 0
    %100 = vmatpush1.bf16.msra.mxu0 0
    %101 = vmatprep.subr.bf16.mxu0 0
    %102 = vmatpush1.bf16.msra.mxu0 0
    %103 = vmatprep.subr.bf16.mxu0 0
    %104 = vmatpush1.bf16.msra.mxu0 0
    %105 = vmatprep.subr.bf16.mxu0 0
    %106 = vmatpush1.bf16.msra.mxu0 0
    %107 = vmatprep.subr.bf16.mxu0 0
    %108 = vmatpush1.bf16.msra.mxu0 0
    %109 = vmatprep.subr.bf16.mxu0 0
    %110 = vmatpush1.bf16.msra.mxu0 0
    %111 = vmatprep.mubr.bf16.mxu0 0
    %112 = vmatmul.mubr.bf16.gmra.mrb[0].mxu0 %v77
    %v113 = vpop.f32.mrb[0].mxu0
    %v114 = vadd.f32 0.0, %v113
    %v115 = vpop.f32.mrb[0].mxu0
    %v116 = vpop.f32.mrb[0].mxu0
    %v117 = vadd.f32 0.0, %v116
    %v118 = vpop.f32.mrb[0].mxu0
    %119 = vdwg.mxu0
    %v121 = vsel %vm75, %v48, 0
    %123 = vmatprep.subr.bf16.mxu0 0
    %124 = vmatpush1.bf16.msra.mxu0 %v71
    %125 = vmatprep.subr.bf16.mxu0 0
    %126 = vmatpush1.bf16.msra.mxu0 %v72
    %127 = vmatprep.subr.bf16.mxu0 0
    %128 = vmatpush1.bf16.msra.mxu0 0
    %129 = vmatprep.subr.bf16.mxu0 0
    %130 = vmatpush1.bf16.msra.mxu0 0
    %131 = vmatprep.subr.bf16.mxu0 0
    %132 = vmatpush1.bf16.msra.mxu0 0
    %133 = vmatprep.subr.bf16.mxu0 0
    %134 = vmatpush1.bf16.msra.mxu0 0
    %135 = vmatprep.subr.bf16.mxu0 0
    %136 = vmatpush1.bf16.msra.mxu0 0
    %137 = vmatprep.subr.bf16.mxu0 0
    %138 = vmatpush1.bf16.msra.mxu0 0
    %139 = vmatprep.subr.bf16.mxu0 0
    %140 = vmatpush1.bf16.msra.mxu0 0
    %141 = vmatprep.subr.bf16.mxu0 0
    %142 = vmatpush1.bf16.msra.mxu0 0
    %143 = vmatprep.subr.bf16.mxu0 0
    %144 = vmatpush1.bf16.msra.mxu0 0
    %145 = vmatprep.subr.bf16.mxu0 0
    %146 = vmatpush1.bf16.msra.mxu0 0
    %147 = vmatprep.subr.bf16.mxu0 0
    %148 = vmatpush1.bf16.msra.mxu0 0
    %149 = vmatprep.subr.bf16.mxu0 0
    %150 = vmatpush1.bf16.msra.mxu0 0
    %151 = vmatprep.subr.bf16.mxu0 0
    %152 = vmatpush1.bf16.msra.mxu0 0
    %153 = vmatprep.subr.bf16.mxu0 0
    %154 = vmatpush1.bf16.msra.mxu0 0
    %155 = vmatprep.mubr.bf16.mxu0 0
    %156 = vmatmul.mubr.bf16.gmra.mrb[0].mxu0 %v121
    %v157 = vpop.f32.mrb[0].mxu0
    %v158 = vadd.f32 %v114, %v157
    %v159 = vpop.f32.mrb[0].mxu0
    %v160 = vpop.f32.mrb[0].mxu0
    %v161 = vadd.f32 %v117, %v160
    %v162 = vpop.f32.mrb[0].mxu0
    %163 = vdwg.mxu0
    %v165 = vsel %vm75, %v58, 0
    %167 = vmatprep.subr.bf16.mxu0 0
    %168 = vmatpush1.bf16.msra.mxu0 %v71
    %169 = vmatprep.subr.bf16.mxu0 0
    %170 = vmatpush1.bf16.msra.mxu0 %v72
    %171 = vmatprep.subr.bf16.mxu0 0
    %172 = vmatpush1.bf16.msra.mxu0 0
    %173 = vmatprep.subr.bf16.mxu0 0
    %174 = vmatpush1.bf16.msra.mxu0 0
    %175 = vmatprep.subr.bf16.mxu0 0
    %176 = vmatpush1.bf16.msra.mxu0 0
    %177 = vmatprep.subr.bf16.mxu0 0
    %178 = vmatpush1.bf16.msra.mxu0 0
    %179 = vmatprep.subr.bf16.mxu0 0
    %180 = vmatpush1.bf16.msra.mxu0 0
    %181 = vmatprep.subr.bf16.mxu0 0
    %182 = vmatpush1.bf16.msra.mxu0 0
    %183 = vmatprep.subr.bf16.mxu0 0
    %184 = vmatpush1.bf16.msra.mxu0 0
    %185 = vmatprep.subr.bf16.mxu0 0
    %186 = vmatpush1.bf16.msra.mxu0 0
    %187 = vmatprep.subr.bf16.mxu0 0
    %188 = vmatpush1.bf16.msra.mxu0 0
    %189 = vmatprep.subr.bf16.mxu0 0
    %190 = vmatpush1.bf16.msra.mxu0 0
    %191 = vmatprep.subr.bf16.mxu0 0
    %192 = vmatpush1.bf16.msra.mxu0 0
    %193 = vmatprep.subr.bf16.mxu0 0
    %194 = vmatpush1.bf16.msra.mxu0 0
    %195 = vmatprep.subr.bf16.mxu0 0
    %196 = vmatpush1.bf16.msra.mxu0 0
    %197 = vmatprep.subr.bf16.mxu0 0
    %198 = vmatpush1.bf16.msra.mxu0 0
    %199 = vmatprep.mubr.bf16.mxu0 0
    %200 = vmatmul.mubr.bf16.gmra.mrb[0].mxu0 %v165
    %v201 = vpop.f32.mrb[0].mxu0
    %v202 = vadd.f32 0.0, %v201
    %v203 = vpop.f32.mrb[0].mxu0
    %v204 = vpop.f32.mrb[0].mxu0
    %v205 = vadd.f32 0.0, %v204
    %v206 = vpop.f32.mrb[0].mxu0
    %207 = vdwg.mxu0
    %v208 = vadd.f32 %v158, %v202
    %v209 = vadd.f32 %v161, %v205
    %v210 = vld [vmem:[%s1] sm:$0x1]
    %v211 = vld [vmem:[%s1 + $0x1] sm:$0x1]
    %v212 = vlaneseq
    %v213 = vshrl.u32 %v212, 7
    %v214 = vsub.s32 0, %v213
    %v215 = vrot.slane %v210, %v214
    %vm216 = vcmp.gt.f32.partialorder %v208, %v215
    %vm217 = vcmp.gt.f32.partialorder %v209, %v215
    %v218 = vlaneseq
    %v219 = vshrl.u32 %v218, 7
    %v220 = vsub.s32 0, %v219
    %v221 = vrot.slane %v211, %v220
    %vm222 = vcmp.le.f32.partialorder %v208, %v221
    %vm223 = vcmp.le.f32.partialorder %v209, %v221
    %vm224 = vmand %vm216, %vm222
    %vm225 = vmand %vm217, %vm223
    %v226 = vsel %vm224, 1.0, 0.0
    %v227 = vsel %vm225, 1.0, 0.0
    %v228 = vpack.c.bf16 %v227, %v226
    %v230 = vunpack.c.l.b16 %v228
    %v231 = vunpack.c.h.b16 %v228
    %v232 = vpack.c.b16 %v230, %v230
    %v233 = vpack.c.b16 %v231, %v231
    %236 = vst [vmem:[#allocation7] sm:$0xf] %v232
    %237 = vst [vmem:[#allocation7 + $0x4] sm:$0xf] %v233
    // Predicated region
    $region22: #{tpu_custom_call.1} parent=1 // pred_check
      _
    $region23: #{tpu_custom_call.1} parent=1 // pred_check_branch
      %239 = sbr.rel (0) target = $region25
    $region24: #{tpu_custom_call.1} parent=1 // pred_region
      %s241 = ssub.s32 128, 128
      %242 = vsyncadd [#allocation4], %s241
      %s243 = sshll.u32 [#allocation7], 4
      %s244 = int_to_ptr.vmem [resolvable:$true] %s243
      %249 = dma.vmem_to_hbm [thread:$0]  %s244, 128, %s3, [#allocation4], 64, 64, 4
    $region25: #{tpu_custom_call.1} parent=1 // pred_fallthru
      _
    // Predicated region
    $region26: #{tpu_custom_call.1} parent=1 // pred_check
      _
    $region27: #{tpu_custom_call.1} parent=1 // pred_check_branch
      %251 = sbr.rel (0) target = $region29
    $region28: #{tpu_custom_call.1} parent=1 // pred_region
      %252 = dma.done [#allocation4], 128
    $region29: #{tpu_custom_call.1} parent=1 // pred_fallthru
      _
    %253 = vsyncpa [#allocation3], 1
    %254 = vsyncpa [#allocation6], 1
    %255 = vsyncpa [#allocation4], 1

</llo_original>
